<compile_context>
chip_gen: v7x
topology: tpu7x:2x2x1
jax: 0.10.0
libtpu: 0.0.40
codegen_flags: <defaults>
</compile_context>

<pallas_src>
import jax
import jax.numpy as jnp
from jax.experimental import pallas as pl
from jax.experimental.pallas import tpu as pltpu


def _round_up(n, m):
    return (n + m - 1) // m * m


def _patch_embed_kernel(x_ref, w_ref, b_ref, o_ref):
    # x_ref: (TM, Kp) patch tile; w_ref: (Kp, Ep) weight (resident);
    # b_ref: (1, Ep) f32 bias (resident); o_ref: (TM, Ep) output tile.
    acc = jnp.dot(x_ref[...], w_ref[...], preferred_element_type=jnp.float32)
    o_ref[...] = (acc + b_ref[...]).astype(o_ref.dtype)


def patch_embedding(x, weight, bias, patch_size, *, compute_dtype=None, tile_m=None):
    """Forward pass of PatchEmbedding.

    x:      (B, C, H, W)  -- NCHW, like PyTorch
    weight: (E, C, P, P)  -- nn.Conv2d weight layout
    bias:   (E,)          -- nn.Conv2d bias
    returns (B, num_patches, E) with num_patches = (H//P) * (W//P)

    compute_dtype: optional dtype (e.g. jnp.bfloat16) for the MXU operands;
                   accumulation and bias add are always f32.
    tile_m:        optional override for the M tile size (rounded up to 8).
    """
    B, C, H, W = x.shape
    E = weight.shape[0]
    P = patch_size
    Hp, Wp = H // P, W // P
    num_patches = Hp * Wp
    out_dtype = x.dtype

    # ---- glue (plain JAX): extract non-overlapping patches, flatten in
    # (c, kh, kw) order to match nn.Conv2d's weight layout.
    patches = x.reshape(B, C, Hp, P, Wp, P)
    patches = patches.transpose(0, 2, 4, 1, 3, 5)
    patches = patches.reshape(B * num_patches, C * P * P)

    # conv weight (E, C, P, P) -> matmul weight (C*P*P, E)
    w_mat = weight.reshape(E, C * P * P).T
    b_mat = bias.astype(jnp.float32).reshape(1, E)

    M, K = patches.shape

    # ---- lane-dense padding of K and E (multiples of 128).
    Kp = _round_up(K, 128)
    Ep = _round_up(E, 128)

    in_b = jnp.dtype(compute_dtype).itemsize if compute_dtype is not None \
        else jnp.dtype(patches.dtype).itemsize
    w_b = in_b if compute_dtype is not None else jnp.dtype(w_mat.dtype).itemsize
    out_b = jnp.dtype(out_dtype).itemsize

    # ---- M tile: as big as a conservative VMEM budget allows (amortizes the
    # per-grid-step overhead), then shrunk to minimize tail padding.
    fixed_vmem = 2 * Kp * Ep * w_b + 2 * Ep * 4            # resident weight + bias
    per_row = 2 * Kp * in_b + 2 * Ep * out_b               # double-buffered in/out rows
    if tile_m is None:
        budget = 20 * 1024 * 1024
        avail = max(budget - fixed_vmem, 1 << 20)
        tm_max = max(8, min(1024, (avail // per_row) // 8 * 8))
        n_tiles = -(-M // tm_max)
        tile_m = _round_up(-(-M // n_tiles), 8)
    else:
        tile_m = max(8, _round_up(tile_m, 8))
    Mp = _round_up(M, tile_m)
    num_tiles = Mp // tile_m

    if (Mp, Kp) != (M, K):
        patches = jnp.pad(patches, ((0, Mp - M), (0, Kp - K)))
    if (Kp, Ep) != (K, E):
        w_mat = jnp.pad(w_mat, ((0, Kp - K), (0, Ep - E)))
    if Ep != E:
        b_mat = jnp.pad(b_mat, ((0, 0), (0, Ep - E)))

    if compute_dtype is not None:
        patches = patches.astype(compute_dtype)
        w_mat = w_mat.astype(compute_dtype)

    cost = pl.CostEstimate(
        flops=2 * Mp * Kp * Ep,
        transcendentals=0,
        bytes_accessed=Mp * Kp * in_b + Kp * Ep * w_b + Mp * Ep * out_b + Ep * 4,
    )

    est_vmem = fixed_vmem + tile_m * per_row
    vmem_limit = int(min(max(est_vmem + (4 << 20), 32 * 1024 * 1024),
                         56 * 1024 * 1024))

    out_flat = pl.pallas_call(
        _patch_embed_kernel,
        out_shape=jax.ShapeDtypeStruct((Mp, Ep), out_dtype),
        grid_spec=pltpu.PrefetchScalarGridSpec(
            num_scalar_prefetch=0,
            grid=(num_tiles,),
            in_specs=[
                pl.BlockSpec((tile_m, Kp), lambda i: (i, 0)),  # patch tile (pipelined)
                pl.BlockSpec((Kp, Ep), lambda i: (0, 0)),      # weight (resident)
                pl.BlockSpec((1, Ep), lambda i: (0, 0)),       # bias (resident)
            ],
            out_specs=pl.BlockSpec((tile_m, Ep), lambda i: (i, 0)),
        ),
        compiler_params=pltpu.CompilerParams(
            dimension_semantics=("parallel",),
            vmem_limit_bytes=vmem_limit,
        ),
        cost_estimate=cost,
    )(patches, w_mat, b_mat)

    # strip M / E padding, restore (B, num_patches, E)
    out = out_flat[:M, :E]
    return out.reshape(B, num_patches, E)


def _reference(x, weight, bias, patch_size):
    P = patch_size
    B, C, H, W = x.shape
    E = weight.shape[0]
    ref = jax.lax.conv_general_dilated(
        x, weight, window_strides=(P, P), padding="VALID",
        dimension_numbers=("NCHW", "OIHW", "NCHW"))
    ref = ref + bias.reshape(1, E, 1, 1)
    return ref.reshape(B, E, -1).transpose(0, 2, 1)


if __name__ == "__main__":
    # Small shapes consistent with the module:
    #   batch=2, in_chans=4, spatial=16x16, patch_size=8 -> num_patches=4, embed_dim=32
    B, C, H, W = 2, 4, 16, 16
    P = 8
    E = 32

    key = jax.random.PRNGKey(0)
    kx, kw, kb = jax.random.split(key, 3)

    x = jax.random.normal(kx, (B, C, H, W), dtype=jnp.float32)
    weight = jax.random.normal(kw, (E, C, P, P), dtype=jnp.float32) * 0.02
    bias = jax.random.normal(kb, (E,), dtype=jnp.float32) * 0.02

    out = patch_embedding(x, weight, bias, patch_size=P)
    out = jax.block_until_ready(out)
    ref = _reference(x, weight, bias, P)
    assert out.shape == (B, (H // P) * (W // P), E)
    assert jnp.allclose(out, ref, atol=1e-4, rtol=1e-4)

    # Second config exercising multi-tile M grid + tail padding (M=48, TM=32 -> 2 tiles).
    B2, H2, W2 = 3, 32, 32
    x2 = jax.random.normal(kx, (B2, C, H2, W2), dtype=jnp.float32)
    out2 = patch_embedding(x2, weight, bias, patch_size=P, tile_m=32)
    out2 = jax.block_until_ready(out2)
    ref2 = _reference(x2, weight, bias, P)
    assert out2.shape == (B2, (H2 // P) * (W2 // P), E)
    assert jnp.allclose(out2, ref2, atol=1e-4, rtol=1e-4)

    # Third config: auto tile_m path with a non-trivial M (M=3*16=48, one tile).
    out3 = patch_embedding(x2, weight, bias, patch_size=P)
    out3 = jax.block_until_ready(out3)
    assert jnp.allclose(out3, ref2, atol=1e-4, rtol=1e-4)

    print("KERNEL_OK")
</pallas_src>

<mosaic_0001>
module attributes {stable_mosaic.version = 11 : i64} {
  func.func @_patch_embed_kernel(%arg0: i32, %arg1: memref<8x256xf32, #tpu.memory_space<vmem>>, %arg2: memref<256x128xf32, #tpu.memory_space<vmem>>, %arg3: memref<1x128xf32, #tpu.memory_space<vmem>>, %arg4: memref<8x128xf32, #tpu.memory_space<vmem>>) attributes {dimension_semantics = [#tpu.dimension_semantics<parallel>], iteration_bounds = array<i64: 1>, scalar_prefetch = 0 : i64, scratch_operands = 0 : i64, tpu.core_type = #tpu.core_type<tc>, window_params = [{transform_indices = @transform_0, window_bounds = array<i64: 8, 256>}, {pipeline_mode = #tpu.pipeline_mode<synchronous>, transform_indices = @transform_1, window_bounds = array<i64: 256, 128>}, {pipeline_mode = #tpu.pipeline_mode<synchronous>, transform_indices = @transform_2, window_bounds = array<i64: 1, 128>}, {transform_indices = @transform_3, window_bounds = array<i64: 8, 128>}]} {
    %c0 = arith.constant 0 : index
    %c0_0 = arith.constant 0 : index
    %0 = vector.load %arg1[%c0, %c0_0] : memref<8x256xf32, #tpu.memory_space<vmem>>, vector<8x256xf32>
    %c0_1 = arith.constant 0 : index
    %c0_2 = arith.constant 0 : index
    %1 = vector.load %arg2[%c0_1, %c0_2] : memref<256x128xf32, #tpu.memory_space<vmem>>, vector<256x128xf32>
    %cst = arith.constant dense<0.000000e+00> : vector<8x128xf32>
    %2 = tpu.matmul %0, %1, %cst {dimension_numbers = #tpu.dot_dimension_numbers<[1], [0], [0], [1], [0, 0, 1, 1], [], []>} : vector<8x256xf32>, vector<256x128xf32>, vector<8x128xf32> -> vector<8x128xf32>
    %c0_3 = arith.constant 0 : index
    %c0_4 = arith.constant 0 : index
    %3 = vector.load %arg3[%c0_3, %c0_4] : memref<1x128xf32, #tpu.memory_space<vmem>>, vector<1x128xf32>
    %4 = vector.broadcast %3 : vector<1x128xf32> to vector<8x128xf32>
    %5 = arith.addf %2, %4 : vector<8x128xf32>
    %c0_5 = arith.constant 0 : index
    %c0_6 = arith.constant 0 : index
    %6 = vector.load %arg4[%c0_5, %c0_6] : memref<8x128xf32, #tpu.memory_space<vmem>>, vector<8x128xf32>
    tpu.vector_store %arg4[%c0_5, %c0_6], %5 {strides = array<i32>} : memref<8x128xf32, #tpu.memory_space<vmem>>, vector<8x128xf32>,
    return
  }
  func.func @transform_0(%arg0: i32) -> (i32, i32) {
    %c0_i32 = arith.constant 0 : i32
    %c0_i32_0 = arith.constant 0 : i32
    return %arg0, %c0_i32 : i32, i32
  }
  func.func @transform_1(%arg0: i32) -> (i32, i32) {
    %c0_i32 = arith.constant 0 : i32
    %c0_i32_0 = arith.constant 0 : i32
    %c0_i32_1 = arith.constant 0 : i32
    return %c0_i32, %c0_i32_0 : i32, i32
  }
  func.func @transform_2(%arg0: i32) -> (i32, i32) {
    %c0_i32 = arith.constant 0 : i32
    %c0_i32_0 = arith.constant 0 : i32
    %c0_i32_1 = arith.constant 0 : i32
    return %c0_i32, %c0_i32_0 : i32, i32
  }
  func.func @transform_3(%arg0: i32) -> (i32, i32) {
    %c0_i32 = arith.constant 0 : i32
    %c0_i32_0 = arith.constant 0 : i32
    return %arg0, %c0_i32 : i32, i32
  }
}

</mosaic_0001>

<llo_original>
// kernel: tpu_custom_call.1
$region0: #{tpu_custom_call.1}
  #allocation0 [shape = 'u32[]', space=smem, size = 0x4, offset = 0x4, fixed_abs, tag = 'smem constant byte address 0x4 - core index']
  #allocation1 [shape = 'u32[144,128]{1,0:T(1,128)}', space=vmem, size = 0x12000, scoped, tag = 'internal scratch']
  %s0 = inlined_call_operand.hbm [shape: f32[8,256], index: 0, kind: input, shape index: {}]
  %s1 = inlined_call_operand.hbm [shape: f32[256,128], index: 1, kind: input, shape index: {}]
  %s2 = inlined_call_operand.vmem [shape: f32[1,128], index: 2, kind: input, shape index: {}]
  %s3 = inlined_call_operand.hbm [shape: f32[8,128], index: 3, kind: output, shape index: {}]
  %s4 = sld [smem:[#allocation0]]
  $region30: #{tpu_custom_call.1} parent=0
    _
  %s6 = ssub.s32 1, %s4
  %s7 = scalar_select 0, %s6, %s4
  $region1: #{tpu_custom_call.1} parent=0
    #allocation2 [shape = 'u8[8192]{0}', space=vmem, size = 0x2000, scoped, tag = 'input window, operand 0, single buffered']
    #allocation3 [shape = 's32[1]{0}', space=sflag, size = 0x4, scoped, tag = 'scoped memory for tpu_custom_call.1']
    #allocation4 [shape = 's32[1]{0}', space=sflag, size = 0x4, scoped, tag = 'scoped memory for tpu_custom_call.1']
    #allocation5 [shape = 'u8[131072]{0}', space=vmem, size = 0x20000, scoped, tag = 'input window, operand 1, single buffered']
    #allocation6 [shape = 's32[1]{0}', space=sflag, size = 0x4, scoped, tag = 'scoped memory for tpu_custom_call.1']
    #allocation7 [shape = 'u8[4096]{0}', space=vmem, size = 0x1000, scoped, tag = 'output window, operand 0, single buffered']
    %8 = vsyncpa [#allocation3], 0
    %9 = vsyncpa [#allocation6], 0
    %10 = vsyncpa [#allocation4], 0
    // Predicated region
    $region2: #{tpu_custom_call.1} parent=1 // pred_check
      _
    $region3: #{tpu_custom_call.1} parent=1 // pred_check_branch
      %12 = sbr.rel (0) target = $region5
    $region4: #{tpu_custom_call.1} parent=1 // pred_region
      %s14 = ssub.s32 256, 256
      %15 = vsyncadd [#allocation3], %s14
      %s17 = sshll.u32 [#allocation2], 4
      %s18 = int_to_ptr.vmem [resolvable:$true] %s17
      %20 = dma.hbm_to_vmem [thread:$0]  %s0, 256, %s18, [#allocation3]
    $region5: #{tpu_custom_call.1} parent=1 // pred_fallthru
      _
    // Predicated region
    $region6: #{tpu_custom_call.1} parent=1 // pred_check
      _
    $region7: #{tpu_custom_call.1} parent=1 // pred_check_branch
      %22 = sbr.rel (0) target = $region9
    $region8: #{tpu_custom_call.1} parent=1 // pred_region
      %s24 = ssub.s32 4096, 4096
      %25 = vsyncadd [#allocation6], %s24
      %s26 = sshll.u32 [#allocation5], 4
      %s27 = int_to_ptr.vmem [resolvable:$true] %s26
      %32 = dma.hbm_to_vmem [thread:$0]  %s1, 4096, %s27, [#allocation6], 128, 128, 8
    $region9: #{tpu_custom_call.1} parent=1 // pred_fallthru
      _
    // Predicated region
    $region10: #{tpu_custom_call.1} parent=1 // pred_check
      _
    $region11: #{tpu_custom_call.1} parent=1 // pred_check_branch
      %34 = sbr.rel (0) target = $region13
    $region12: #{tpu_custom_call.1} parent=1 // pred_region
      _
    $region13: #{tpu_custom_call.1} parent=1 // pred_fallthru
      _
    // Predicated region
    $region14: #{tpu_custom_call.1} parent=1 // pred_check
      _
    $region15: #{tpu_custom_call.1} parent=1 // pred_check_branch
      %36 = sbr.rel (0) target = $region17
    $region16: #{tpu_custom_call.1} parent=1 // pred_region
      %37 = dma.done [#allocation3], 256
    $region17: #{tpu_custom_call.1} parent=1 // pred_fallthru
      _
    // Predicated region
    $region18: #{tpu_custom_call.1} parent=1 // pred_check
      _
    $region19: #{tpu_custom_call.1} parent=1 // pred_check_branch
      %39 = sbr.rel (0) target = $region21
    $region20: #{tpu_custom_call.1} parent=1 // pred_region
      %40 = dma.done [#allocation6], 4096
    $region21: #{tpu_custom_call.1} parent=1 // pred_fallthru
      _
    %v41 = vld [vmem:[#allocation2] sm:$0xff]
    %v42 = vld [vmem:[#allocation2 + $0x8] sm:$0xff]
    %v43 = vld [vmem:[#allocation5] sm:$0xff]
    %v44 = vld [vmem:[#allocation5 + $0x8] sm:$0xff]
    %v45 = vld [vmem:[#allocation5 + $0x10] sm:$0xff]
    %v46 = vld [vmem:[#allocation5 + $0x18] sm:$0xff]
    %v47 = vld [vmem:[#allocation5 + $0x20] sm:$0xff]
    %v48 = vld [vmem:[#allocation5 + $0x28] sm:$0xff]
    %v49 = vld [vmem:[#allocation5 + $0x30] sm:$0xff]
    %v50 = vld [vmem:[#allocation5 + $0x38] sm:$0xff]
    %v51 = vld [vmem:[#allocation5 + $0x40] sm:$0xff]
    %v52 = vld [vmem:[#allocation5 + $0x48] sm:$0xff]
    %v53 = vld [vmem:[#allocation5 + $0x50] sm:$0xff]
    %v54 = vld [vmem:[#allocation5 + $0x58] sm:$0xff]
    %v55 = vld [vmem:[#allocation5 + $0x60] sm:$0xff]
    %v56 = vld [vmem:[#allocation5 + $0x68] sm:$0xff]
    %v57 = vld [vmem:[#allocation5 + $0x70] sm:$0xff]
    %v58 = vld [vmem:[#allocation5 + $0x78] sm:$0xff]
    %v59 = vld [vmem:[#allocation5 + $0x80] sm:$0xff]
    %v60 = vld [vmem:[#allocation5 + $0x88] sm:$0xff]
    %v61 = vld [vmem:[#allocation5 + $0x90] sm:$0xff]
    %v62 = vld [vmem:[#allocation5 + $0x98] sm:$0xff]
    %v63 = vld [vmem:[#allocation5 + $0xa0] sm:$0xff]
    %v64 = vld [vmem:[#allocation5 + $0xa8] sm:$0xff]
    %v65 = vld [vmem:[#allocation5 + $0xb0] sm:$0xff]
    %v66 = vld [vmem:[#allocation5 + $0xb8] sm:$0xff]
    %v67 = vld [vmem:[#allocation5 + $0xc0] sm:$0xff]
    %v68 = vld [vmem:[#allocation5 + $0xc8] sm:$0xff]
    %v69 = vld [vmem:[#allocation5 + $0xd0] sm:$0xff]
    %v70 = vld [vmem:[#allocation5 + $0xd8] sm:$0xff]
    %v71 = vld [vmem:[#allocation5 + $0xe0] sm:$0xff]
    %v72 = vld [vmem:[#allocation5 + $0xe8] sm:$0xff]
    %v73 = vld [vmem:[#allocation5 + $0xf0] sm:$0xff]
    %v74 = vld [vmem:[#allocation5 + $0xf8] sm:$0xff]
    %v75 = vld [vmem:[%s2] sm:$0x1]
    %v77 = vlaneseq
    %v78 = vshrl.u32 %v77, 7
    %v79 = vsub.s32 0, %v78
    %v80 = vrot.slane %v75, %v79
    %82 = vmatprep.subr.mxu0 0.0
    %83 = vmatpush1.msra.mxu0 %v43
    %84 = vmatprep.subr.mxu0 0.0
    %85 = vmatpush1.msra.mxu0 %v44
    %86 = vmatprep.subr.mxu0 0.0
    %87 = vmatpush1.msra.mxu0 %v45
    %88 = vmatprep.subr.mxu0 0.0
    %89 = vmatpush1.msra.mxu0 %v46
    %90 = vmatprep.subr.mxu0 0.0
    %91 = vmatpush1.msra.mxu0 %v47
    %92 = vmatprep.subr.mxu0 0.0
    %93 = vmatpush1.msra.mxu0 %v48
    %94 = vmatprep.subr.mxu0 0.0
    %95 = vmatpush1.msra.mxu0 %v49
    %96 = vmatprep.subr.mxu0 0.0
    %97 = vmatpush1.msra.mxu0 %v50
    %98 = vmatprep.subr.mxu0 0.0
    %99 = vmatpush1.msra.mxu0 %v51
    %100 = vmatprep.subr.mxu0 0.0
    %101 = vmatpush1.msra.mxu0 %v52
    %102 = vmatprep.subr.mxu0 0.0
    %103 = vmatpush1.msra.mxu0 %v53
    %104 = vmatprep.subr.mxu0 0.0
    %105 = vmatpush1.msra.mxu0 %v54
    %106 = vmatprep.subr.mxu0 0.0
    %107 = vmatpush1.msra.mxu0 %v55
    %108 = vmatprep.subr.mxu0 0.0
    %109 = vmatpush1.msra.mxu0 %v56
    %110 = vmatprep.subr.mxu0 0.0
    %111 = vmatpush1.msra.mxu0 %v57
    %112 = vmatprep.subr.mxu0 0.0
    %113 = vmatpush1.msra.mxu0 %v58
    %114 = vmatprep.subr.mxu0 0.0
    %115 = vmatpush1.msra.mxu0 %v59
    %116 = vmatprep.subr.mxu0 0.0
    %117 = vmatpush1.msra.mxu0 %v60
    %118 = vmatprep.subr.mxu0 0.0
    %119 = vmatpush1.msra.mxu0 %v61
    %120 = vmatprep.subr.mxu0 0.0
    %121 = vmatpush1.msra.mxu0 %v62
    %122 = vmatprep.subr.mxu0 0.0
    %123 = vmatpush1.msra.mxu0 %v63
    %124 = vmatprep.subr.mxu0 0.0
    %125 = vmatpush1.msra.mxu0 %v64
    %126 = vmatprep.subr.mxu0 0.0
    %127 = vmatpush1.msra.mxu0 %v65
    %128 = vmatprep.subr.mxu0 0.0
    %129 = vmatpush1.msra.mxu0 %v66
    %130 = vmatprep.subr.mxu0 0.0
    %131 = vmatpush1.msra.mxu0 %v67
    %132 = vmatprep.subr.mxu0 0.0
    %133 = vmatpush1.msra.mxu0 %v68
    %134 = vmatprep.subr.mxu0 0.0
    %135 = vmatpush1.msra.mxu0 %v69
    %136 = vmatprep.subr.mxu0 0.0
    %137 = vmatpush1.msra.mxu0 %v70
    %138 = vmatprep.subr.mxu0 0.0
    %139 = vmatpush1.msra.mxu0 %v71
    %140 = vmatprep.subr.mxu0 0.0
    %141 = vmatpush1.msra.mxu0 %v72
    %142 = vmatprep.subr.mxu0 0.0
    %143 = vmatpush1.msra.mxu0 %v73
    %144 = vmatprep.subr.mxu0 0.0
    %145 = vmatpush1.msra.mxu0 %v74
    %146 = vmatprep.mubr.f32.mxu0 %v42
    %147 = vmatmul.mubr.f32.gmra.mrb[0].mxu0 %v41
    %v148 = vpop.f32.mrb[0].mxu0
    %v149 = vadd.f32 %v80, %v148
    %v150 = vpop.f32.mrb[0].mxu0
    %151 = vdwg.mxu0
    %152 = vst [vmem:[#allocation7] sm:$0xff] %v149
    // Predicated region
    $region22: #{tpu_custom_call.1} parent=1 // pred_check
      _
    $region23: #{tpu_custom_call.1} parent=1 // pred_check_branch
      %154 = sbr.rel (0) target = $region25
    $region24: #{tpu_custom_call.1} parent=1 // pred_region
      %s156 = ssub.s32 128, 128
      %157 = vsyncadd [#allocation4], %s156
      %s159 = sshll.u32 [#allocation7], 4
      %s160 = int_to_ptr.vmem [resolvable:$true] %s159
      %162 = dma.vmem_to_hbm [thread:$0]  %s160, 128, %s3, [#allocation4]
    $region25: #{tpu_custom_call.1} parent=1 // pred_fallthru
      _
    // Predicated region
    $region26: #{tpu_custom_call.1} parent=1 // pred_check
      _
    $region27: #{tpu_custom_call.1} parent=1 // pred_check_branch
      %164 = sbr.rel (0) target = $region29
    $region28: #{tpu_custom_call.1} parent=1 // pred_region
      %165 = dma.done [#allocation4], 128
    $region29: #{tpu_custom_call.1} parent=1 // pred_fallthru
      _
    %166 = vsyncpa [#allocation3], 1
    %167 = vsyncpa [#allocation6], 1
    %168 = vsyncpa [#allocation4], 1

</llo_original>
